<compile_context>
chip_gen: v7x
topology: tpu7x:2x2x1
jax: 0.10.0
libtpu: 0.0.40
codegen_flags: <defaults>
</compile_context>

<pallas_src>
import jax
import jax.numpy as jnp
from jax.experimental import pallas as pl
from jax.experimental.pallas import tpu as pltpu

# ----- small, self-consistent shapes (module defaults scaled down) -----
B = 2                 # batch
N = 8                 # max_len (token count after start-token gather)
BERT_DIM = 128        # bert_dim     (module default 768)
HIDDEN2 = 128         # hidden_dim*2 (module default 600)
NUM_BERT_LAYERS = 4   # synthetic BERT depth
BERT_LAYERS = (1, 2, 3, 4)   # analogous to (1, 5, 9, 12)
NUM_SEL = len(BERT_LAYERS)
NUM_HEADS = 2
UPPER = 0.25
LOWER = 0.01
LN_EPS = 1e-5
NUM_CLASSES = 3


def bert4gcn_kernel(hid_ref, wg_ref, bg_ref, gamma_ref, beta_ref,
                    pool_ref, wcls_ref, bcls_ref, out_ref):
    """Single grid step: whole (flattened) batch at once, live path only.

    hid_ref  : (B*N, BERT_DIM)  bf16  last selected BERT layer hidden states
    wg_ref   : (BERT_DIM, HIDDEN2) bf16  guidance_trans[-1] weight
    bg_ref   : (1, HIDDEN2)     f32   guidance_trans[-1] bias
    gamma/beta: (1, HIDDEN2)    f32   LayerNorm affine
    pool_ref : (B, B*N)         f32   block-diagonal aspect-mask rows
    wcls_ref : (HIDDEN2, NUM_CLASSES) f32
    bcls_ref : (1, NUM_CLASSES) f32
    out_ref  : (B, NUM_CLASSES) f32
    """
    # guidance_trans[-1] + ReLU  (bf16 MXU operands, f32 accumulate)
    g = jnp.dot(hid_ref[...], wg_ref[...], preferred_element_type=jnp.float32)
    g = jnp.maximum(g + bg_ref[...], 0.0)
    # guidance_drop: eval mode -> identity
    # LayerNorm over the feature dim (biased variance, eps=1e-5)
    mu = jnp.mean(g, axis=-1, keepdims=True)
    var = jnp.mean((g - mu) ** 2, axis=-1, keepdims=True)
    feat = (g - mu) * jax.lax.rsqrt(var + LN_EPS) * gamma_ref[...] + beta_ref[...]

    # aspect pooling: block-diagonal mask matmul + approx-reciprocal normalize
    pool = pool_ref[...]                                     # (B, B*N)
    masked_sum = jnp.dot(pool, feat, preferred_element_type=jnp.float32)  # (B, H2)
    denom = jnp.sum(pool, axis=-1, keepdims=True)            # (B, 1) = per-batch count
    aspects = masked_sum * pl.reciprocal(denom, approx=True)

    # classifier
    logits = (jnp.dot(aspects, wcls_ref[...], preferred_element_type=jnp.float32)
              + bcls_ref[...])                               # (B, NUM_CLASSES)
    out_ref[...] = logits


def bert4gcn_forward(last_hidden, aspect_mask, params):
    """last_hidden: (B, N, BERT_DIM) f32 hidden states of the LAST selected
    BERT layer (the only layer whose guidance transform reaches the output).
    aspect_mask: (B, N) f32 {0,1}."""
    (wg, bg, gamma, beta, _wgcn, _bgcn, wcls, bcls) = params

    hid = last_hidden.reshape(B * N, BERT_DIM).astype(jnp.bfloat16)
    wg_last = wg[NUM_SEL - 1].astype(jnp.bfloat16)
    bg_last = bg[NUM_SEL - 1].reshape(1, HIDDEN2)
    # block-diagonal pooling matrix: pool[b, b*N + n] = aspect_mask[b, n]
    pool = (jnp.eye(B, dtype=jnp.float32)[:, :, None]
            * aspect_mask[None, :, :]).reshape(B, B * N)

    in_specs = [
        pl.BlockSpec((B * N, BERT_DIM),       lambda i: (0, 0)),
        pl.BlockSpec((BERT_DIM, HIDDEN2),     lambda i: (0, 0)),
        pl.BlockSpec((1, HIDDEN2),            lambda i: (0, 0)),
        pl.BlockSpec((1, HIDDEN2),            lambda i: (0, 0)),
        pl.BlockSpec((1, HIDDEN2),            lambda i: (0, 0)),
        pl.BlockSpec((B, B * N),              lambda i: (0, 0)),
        pl.BlockSpec((HIDDEN2, NUM_CLASSES),  lambda i: (0, 0)),
        pl.BlockSpec((1, NUM_CLASSES),        lambda i: (0, 0)),
    ]
    out_spec = pl.BlockSpec((B, NUM_CLASSES), lambda i: (0, 0))

    return pl.pallas_call(
        bert4gcn_kernel,
        out_shape=jax.ShapeDtypeStruct((B, NUM_CLASSES), jnp.float32),
        grid=(1,),
        in_specs=in_specs,
        out_specs=out_spec,
        compiler_params=pltpu.CompilerParams(dimension_semantics=("arbitrary",)),
    )(hid, wg_last, bg_last, gamma, beta, pool, wcls, bcls)


# ---------------- glue (gathers / stacking) in plain JAX ----------------
def build_guidance(stack_hidden_states, stack_attentions_mean,
                   token_starts, token_starts_mask):
    gh, ga = [], []
    for i in range(B):
        # index_select over the token dim of (L+1, N, D)
        gh.append(jnp.take(stack_hidden_states[:, i], token_starts[i], axis=1))
        sa = stack_attentions_mean[:, i]                       # (L, N, N)
        sa = sa * token_starts_mask[i].reshape(1, N, 1) \
                * token_starts_mask[i].reshape(1, 1, N)
        sa = jnp.take(sa, token_starts[i], axis=1)
        sa = jnp.take(sa, token_starts[i], axis=2)
        ga.append(sa)
    guidance_states = jnp.stack(gh, axis=1)        # (L+1, B, N, D)
    guidance_attentions = jnp.stack(ga, axis=1)    # (L,   B, N, N)
    return guidance_states, guidance_attentions


def reference_forward(sel_hidden, sel_att, adj, aspect_mask_2d, params):
    """Pure-JAX re-implementation of the FULL original forward loop (dead GCN
    branch included) used as the correctness oracle."""
    (wg, bg, gamma, beta, wgcn, bgcn, wcls, bcls) = params
    feature = None
    for idx in range(NUM_SEL):
        h = sel_hidden[:, idx]                                 # (B, N, BERT_DIM)
        g = jax.nn.relu(jnp.einsum('bnd,dh->bnh', h, wg[idx]) + bg[idx])
        mu = g.mean(-1, keepdims=True)
        var = ((g - mu) ** 2).mean(-1, keepdims=True)
        feature = (g - mu) / jnp.sqrt(var + LN_EPS) * gamma[0] + beta[0]
        if idx < NUM_SEL - 1:
            att = sel_att[:, idx]
            enhanced = jnp.logical_and(
                jnp.logical_or(adj != 0.0, att > UPPER),
                jnp.logical_not(att <= LOWER)).astype(jnp.float32)
            # TODO(synk): GCNWithPosition / RelativePosition are undefined in
            # the source; GraphConvolution is substituted and `pos` ignored.
            hidden = jnp.einsum('bnh,hk->bnk', feature, wgcn[idx])
            denom = enhanced.sum(-1, keepdims=True) + 1.0
            gcn = jax.nn.relu(jnp.einsum('bnm,bmk->bnk', enhanced, hidden) / denom
                              + bgcn[idx])
            feature = gcn   # overwritten by the next iteration (dead dataflow)
    aspects = (feature * aspect_mask_2d[..., None]).sum(1) / \
              aspect_mask_2d.sum(1, keepdims=True)
    return aspects @ wcls + bcls


if __name__ == "__main__":
    key = jax.random.PRNGKey(0)
    ks = jax.random.split(key, 12)

    # TODO(synk): AutoModel ('bert-base-uncased') cannot be loaded; synthesize
    # deterministic hidden states / attentions standing in for BERT outputs.
    hidden_states = jax.random.normal(
        ks[0], (NUM_BERT_LAYERS + 1, B, N, BERT_DIM), jnp.float32)
    attentions = jax.nn.softmax(
        jax.random.normal(ks[1], (NUM_BERT_LAYERS, B, NUM_HEADS, N, N), jnp.float32),
        axis=-1)
    stack_attentions = attentions.mean(axis=2)               # mean over heads

    token_starts = jnp.stack([
        jnp.arange(N, dtype=jnp.int32),
        jnp.clip(jnp.arange(N, dtype=jnp.int32) + 1, 0, N - 1)])
    token_starts_mask = jnp.stack([
        jnp.array([1, 1, 1, 1, 1, 1, 0, 0], jnp.float32),
        jnp.array([1, 1, 1, 1, 1, 1, 1, 0], jnp.float32)])
    adj = jax.random.bernoulli(ks[2], 0.3, (B, N, N)).astype(jnp.float32)
    aspect_mask = jnp.stack([
        jnp.array([0, 0, 1, 1, 0, 0, 0, 0], jnp.float32),
        jnp.array([0, 1, 1, 1, 0, 0, 0, 0], jnp.float32)])

    guidance_states, guidance_attentions = build_guidance(
        hidden_states, stack_attentions, token_starts, token_starts_mask)

    sel_hidden = jnp.transpose(
        guidance_states[jnp.array(BERT_LAYERS)], (1, 0, 2, 3))          # (B,4,N,D)
    sel_att = jnp.transpose(
        guidance_attentions[jnp.array([l - 1 for l in BERT_LAYERS[:-1]])],
        (1, 0, 2, 3))                                                   # (B,3,N,N)

    # deterministic parameter init (shapes from BERT4GCN.__init__)
    wg = 0.05 * jax.random.normal(ks[3], (NUM_SEL, BERT_DIM, HIDDEN2), jnp.float32)
    bg = 0.05 * jax.random.normal(ks[4], (NUM_SEL, HIDDEN2), jnp.float32)
    gamma = jnp.ones((1, HIDDEN2), jnp.float32)
    beta = jnp.zeros((1, HIDDEN2), jnp.float32)
    wgcn = 0.05 * jax.random.normal(ks[5], (NUM_SEL, HIDDEN2, HIDDEN2), jnp.float32)
    bgcn = 0.05 * jax.random.normal(ks[6], (NUM_SEL, HIDDEN2), jnp.float32)
    wcls = 0.05 * jax.random.normal(ks[7], (HIDDEN2, NUM_CLASSES), jnp.float32)
    bcls = 0.05 * jax.random.normal(ks[8], (1, NUM_CLASSES), jnp.float32)
    params = (wg, bg, gamma, beta, wgcn, bgcn, wcls, bcls)

    # kernel: only the live path (last selected layer's hidden states)
    logits = bert4gcn_forward(sel_hidden[:, NUM_SEL - 1], aspect_mask, params)
    logits = jax.block_until_ready(logits)

    # reference: full original forward (dead branches included)
    ref = reference_forward(sel_hidden, sel_att, adj, aspect_mask, params)
    assert logits.shape == (B, NUM_CLASSES)
    assert bool(jnp.all(jnp.isfinite(logits)))
    assert bool(jnp.allclose(logits, ref, rtol=2e-2, atol=2e-2))
    print("KERNEL_OK")
</pallas_src>

<mosaic_0001>
module attributes {stable_mosaic.version = 11 : i64} {
  func.func @bert4gcn_kernel(%arg0: i32, %arg1: memref<16x128xbf16, #tpu.memory_space<vmem>>, %arg2: memref<128x128xbf16, #tpu.memory_space<vmem>>, %arg3: memref<1x128xf32, #tpu.memory_space<vmem>>, %arg4: memref<1x128xf32, #tpu.memory_space<vmem>>, %arg5: memref<1x128xf32, #tpu.memory_space<vmem>>, %arg6: memref<2x16xf32, #tpu.memory_space<vmem>>, %arg7: memref<128x3xf32, #tpu.memory_space<vmem>>, %arg8: memref<1x3xf32, #tpu.memory_space<vmem>>, %arg9: memref<2x3xf32, #tpu.memory_space<vmem>>) attributes {dimension_semantics = [#tpu.dimension_semantics<arbitrary>], iteration_bounds = array<i64: 1>, scalar_prefetch = 0 : i64, scratch_operands = 0 : i64, tpu.core_type = #tpu.core_type<tc>, window_params = [{pipeline_mode = #tpu.pipeline_mode<synchronous>, transform_indices = @transform_0, window_bounds = array<i64: 16, 128>}, {pipeline_mode = #tpu.pipeline_mode<synchronous>, transform_indices = @transform_1, window_bounds = array<i64: 128, 128>}, {pipeline_mode = #tpu.pipeline_mode<synchronous>, transform_indices = @transform_2, window_bounds = array<i64: 1, 128>}, {pipeline_mode = #tpu.pipeline_mode<synchronous>, transform_indices = @transform_3, window_bounds = array<i64: 1, 128>}, {pipeline_mode = #tpu.pipeline_mode<synchronous>, transform_indices = @transform_4, window_bounds = array<i64: 1, 128>}, {pipeline_mode = #tpu.pipeline_mode<synchronous>, transform_indices = @transform_5, window_bounds = array<i64: 2, 16>}, {pipeline_mode = #tpu.pipeline_mode<synchronous>, transform_indices = @transform_6, window_bounds = array<i64: 128, 3>}, {pipeline_mode = #tpu.pipeline_mode<synchronous>, transform_indices = @transform_7, window_bounds = array<i64: 1, 3>}, {pipeline_mode = #tpu.pipeline_mode<synchronous>, transform_indices = @transform_8, window_bounds = array<i64: 2, 3>}]} {
    %c0 = arith.constant 0 : index
    %c0_0 = arith.constant 0 : index
    %0 = vector.load %arg1[%c0, %c0_0] : memref<16x128xbf16, #tpu.memory_space<vmem>>, vector<16x128xbf16>
    %c0_1 = arith.constant 0 : index
    %c0_2 = arith.constant 0 : index
    %1 = vector.load %arg2[%c0_1, %c0_2] : memref<128x128xbf16, #tpu.memory_space<vmem>>, vector<128x128xbf16>
    %cst = arith.constant dense<0.000000e+00> : vector<16x128xf32>
    %2 = tpu.matmul %0, %1, %cst {dimension_numbers = #tpu.dot_dimension_numbers<[1], [0], [0], [1], [0, 0, 1, 1], [], []>} : vector<16x128xbf16>, vector<128x128xbf16>, vector<16x128xf32> -> vector<16x128xf32>
    %c0_3 = arith.constant 0 : index
    %c0_4 = arith.constant 0 : index
    %3 = vector.load %arg3[%c0_3, %c0_4] : memref<1x128xf32, #tpu.memory_space<vmem>>, vector<1x128xf32>
    %4 = vector.broadcast %3 : vector<1x128xf32> to vector<16x128xf32>
    %5 = arith.addf %2, %4 : vector<16x128xf32>
    %cst_5 = arith.constant 0.000000e+00 : f32
    %6 = vector.broadcast %cst_5 : f32 to vector<16x128xf32>
    %7 = arith.maximumf %5, %6 : vector<16x128xf32>
    %cst_6 = arith.constant dense<0.000000e+00> : vector<16xf32>
    %8 = vector.multi_reduction <add>, %7, %cst_6 [1] : vector<16x128xf32> to vector<16xf32>
    %9 = vector.shape_cast %8 : vector<16xf32> to vector<16x1xf32>
    %cst_7 = arith.constant 1.280000e+02 : f32
    %10 = vector.broadcast %cst_7 : f32 to vector<16x1xf32>
    %11 = arith.divf %9, %10 : vector<16x1xf32>
    %12 = vector.broadcast %11 : vector<16x1xf32> to vector<16x128xf32>
    %13 = arith.subf %7, %12 : vector<16x128xf32>
    %14 = arith.mulf %13, %13 : vector<16x128xf32>
    %cst_8 = arith.constant dense<0.000000e+00> : vector<16xf32>
    %15 = vector.multi_reduction <add>, %14, %cst_8 [1] : vector<16x128xf32> to vector<16xf32>
    %16 = vector.shape_cast %15 : vector<16xf32> to vector<16x1xf32>
    %cst_9 = arith.constant 1.280000e+02 : f32
    %17 = vector.broadcast %cst_9 : f32 to vector<16x1xf32>
    %18 = arith.divf %16, %17 : vector<16x1xf32>
    %19 = vector.broadcast %11 : vector<16x1xf32> to vector<16x128xf32>
    %20 = arith.subf %7, %19 : vector<16x128xf32>
    %cst_10 = arith.constant 9.99999974E-6 : f32
    %21 = vector.broadcast %cst_10 : f32 to vector<16x1xf32>
    %22 = arith.addf %18, %21 : vector<16x1xf32>
    %23 = math.rsqrt %22 : vector<16x1xf32>
    %24 = vector.broadcast %23 : vector<16x1xf32> to vector<16x128xf32>
    %25 = arith.mulf %20, %24 : vector<16x128xf32>
    %c0_11 = arith.constant 0 : index
    %c0_12 = arith.constant 0 : index
    %26 = vector.load %arg4[%c0_11, %c0_12] : memref<1x128xf32, #tpu.memory_space<vmem>>, vector<1x128xf32>
    %27 = vector.broadcast %26 : vector<1x128xf32> to vector<16x128xf32>
    %28 = arith.mulf %25, %27 : vector<16x128xf32>
    %c0_13 = arith.constant 0 : index
    %c0_14 = arith.constant 0 : index
    %29 = vector.load %arg5[%c0_13, %c0_14] : memref<1x128xf32, #tpu.memory_space<vmem>>, vector<1x128xf32>
    %30 = vector.broadcast %29 : vector<1x128xf32> to vector<16x128xf32>
    %31 = arith.addf %28, %30 : vector<16x128xf32>
    %c0_15 = arith.constant 0 : index
    %c0_16 = arith.constant 0 : index
    %32 = vector.load %arg6[%c0_15, %c0_16] : memref<2x16xf32, #tpu.memory_space<vmem>>, vector<2x16xf32>
    %cst_17 = arith.constant dense<0.000000e+00> : vector<2x128xf32>
    %33 = tpu.matmul %32, %31, %cst_17 {dimension_numbers = #tpu.dot_dimension_numbers<[1], [0], [0], [1], [0, 0, 1, 1], [], []>} : vector<2x16xf32>, vector<16x128xf32>, vector<2x128xf32> -> vector<2x128xf32>
    %cst_18 = arith.constant dense<0.000000e+00> : vector<2xf32>
    %34 = vector.multi_reduction <add>, %32, %cst_18 [1] : vector<2x16xf32> to vector<2xf32>
    %35 = vector.shape_cast %34 : vector<2xf32> to vector<2x1xf32>
    %36 = tpu.reciprocal %35 {approx = true} : vector<2x1xf32> -> vector<2x1xf32>
    %37 = vector.broadcast %36 : vector<2x1xf32> to vector<2x128xf32>
    %38 = arith.mulf %33, %37 : vector<2x128xf32>
    %c0_19 = arith.constant 0 : index
    %c0_20 = arith.constant 0 : index
    %39 = vector.load %arg7[%c0_19, %c0_20] : memref<128x3xf32, #tpu.memory_space<vmem>>, vector<128x3xf32>
    %cst_21 = arith.constant dense<0.000000e+00> : vector<2x3xf32>
    %40 = tpu.matmul %38, %39, %cst_21 {dimension_numbers = #tpu.dot_dimension_numbers<[1], [0], [0], [1], [0, 0, 1, 1], [], []>} : vector<2x128xf32>, vector<128x3xf32>, vector<2x3xf32> -> vector<2x3xf32>
    %c0_22 = arith.constant 0 : index
    %c0_23 = arith.constant 0 : index
    %41 = vector.load %arg8[%c0_22, %c0_23] : memref<1x3xf32, #tpu.memory_space<vmem>>, vector<1x3xf32>
    %42 = vector.broadcast %41 : vector<1x3xf32> to vector<2x3xf32>
    %43 = arith.addf %40, %42 : vector<2x3xf32>
    %c0_24 = arith.constant 0 : index
    %c0_25 = arith.constant 0 : index
    %44 = vector.load %arg9[%c0_24, %c0_25] : memref<2x3xf32, #tpu.memory_space<vmem>>, vector<2x3xf32>
    tpu.vector_store %arg9[%c0_24, %c0_25], %43 {strides = array<i32>} : memref<2x3xf32, #tpu.memory_space<vmem>>, vector<2x3xf32>,
    return
  }
  func.func @transform_0(%arg0: i32) -> (i32, i32) {
    %c0_i32 = arith.constant 0 : i32
    %c0_i32_0 = arith.constant 0 : i32
    %c0_i32_1 = arith.constant 0 : i32
    return %c0_i32, %c0_i32_0 : i32, i32
  }
  func.func @transform_1(%arg0: i32) -> (i32, i32) {
    %c0_i32 = arith.constant 0 : i32
    %c0_i32_0 = arith.constant 0 : i32
    %c0_i32_1 = arith.constant 0 : i32
    return %c0_i32, %c0_i32_0 : i32, i32
  }
  func.func @transform_2(%arg0: i32) -> (i32, i32) {
    %c0_i32 = arith.constant 0 : i32
    %c0_i32_0 = arith.constant 0 : i32
    %c0_i32_1 = arith.constant 0 : i32
    return %c0_i32, %c0_i32_0 : i32, i32
  }
  func.func @transform_3(%arg0: i32) -> (i32, i32) {
    %c0_i32 = arith.constant 0 : i32
    %c0_i32_0 = arith.constant 0 : i32
    %c0_i32_1 = arith.constant 0 : i32
    return %c0_i32, %c0_i32_0 : i32, i32
  }
  func.func @transform_4(%arg0: i32) -> (i32, i32) {
    %c0_i32 = arith.constant 0 : i32
    %c0_i32_0 = arith.constant 0 : i32
    %c0_i32_1 = arith.constant 0 : i32
    return %c0_i32, %c0_i32_0 : i32, i32
  }
  func.func @transform_5(%arg0: i32) -> (i32, i32) {
    %c0_i32 = arith.constant 0 : i32
    %c0_i32_0 = arith.constant 0 : i32
    %c0_i32_1 = arith.constant 0 : i32
    return %c0_i32, %c0_i32_0 : i32, i32
  }
  func.func @transform_6(%arg0: i32) -> (i32, i32) {
    %c0_i32 = arith.constant 0 : i32
    %c0_i32_0 = arith.constant 0 : i32
    %c0_i32_1 = arith.constant 0 : i32
    return %c0_i32, %c0_i32_0 : i32, i32
  }
  func.func @transform_7(%arg0: i32) -> (i32, i32) {
    %c0_i32 = arith.constant 0 : i32
    %c0_i32_0 = arith.constant 0 : i32
    %c0_i32_1 = arith.constant 0 : i32
    return %c0_i32, %c0_i32_0 : i32, i32
  }
  func.func @transform_8(%arg0: i32) -> (i32, i32) {
    %c0_i32 = arith.constant 0 : i32
    %c0_i32_0 = arith.constant 0 : i32
    %c0_i32_1 = arith.constant 0 : i32
    return %c0_i32, %c0_i32_0 : i32, i32
  }
}

</mosaic_0001>

<llo_original>
// kernel: tpu_custom_call.1
$region0: #{tpu_custom_call.1}
  #allocation0 [shape = 'u32[]', space=smem, size = 0x4, offset = 0x4, fixed_abs, tag = 'smem constant byte address 0x4 - core index']
  #allocation1 [shape = 'u32[144,128]{1,0:T(1,128)}', space=vmem, size = 0x12000, scoped, tag = 'internal scratch']
  %s0 = inlined_call_operand.vmem [shape: bf16[16,128], index: 0, kind: input, shape index: {}]
  %s1 = inlined_call_operand.vmem [shape: bf16[128,128], index: 1, kind: input, shape index: {}]
  %s2 = inlined_call_operand.vmem [shape: f32[1,128], index: 2, kind: input, shape index: {}]
  %s3 = inlined_call_operand.vmem [shape: f32[1,128], index: 3, kind: input, shape index: {}]
  %s4 = inlined_call_operand.vmem [shape: f32[1,128], index: 4, kind: input, shape index: {}]
  %s5 = inlined_call_operand.vmem [shape: f32[2,16], index: 5, kind: input, shape index: {}]
  %s6 = inlined_call_operand.vmem [shape: f32[128,3], index: 6, kind: input, shape index: {}]
  %s7 = inlined_call_operand.vmem [shape: f32[1,3], index: 7, kind: input, shape index: {}]
  %s8 = inlined_call_operand.hbm [shape: f32[2,3], index: 8, kind: output, shape index: {}]
  %s9 = sld [smem:[#allocation0]]
  $region42: #{tpu_custom_call.1} parent=0
    _
  %s11 = ssub.s32 1, %s9
  %s12 = scalar_select 0, %s11, %s9
  $region1: #{tpu_custom_call.1} parent=0
    #allocation2 [shape = 'u8[1024]{0}', space=vmem, size = 0x400, scoped, tag = 'output window, operand 0, single buffered']
    #allocation3 [shape = 's32[1]{0}', space=sflag, size = 0x4, scoped, tag = 'scoped memory for tpu_custom_call.1']
    %13 = vsyncpa [#allocation3], 0
    // Predicated region
    $region2: #{tpu_custom_call.1} parent=1 // pred_check
      _
    $region3: #{tpu_custom_call.1} parent=1 // pred_check_branch
      %15 = sbr.rel (0) target = $region5
    $region4: #{tpu_custom_call.1} parent=1 // pred_region
      _
    $region5: #{tpu_custom_call.1} parent=1 // pred_fallthru
      _
    // Predicated region
    $region6: #{tpu_custom_call.1} parent=1 // pred_check
      _
    $region7: #{tpu_custom_call.1} parent=1 // pred_check_branch
      %17 = sbr.rel (0) target = $region9
    $region8: #{tpu_custom_call.1} parent=1 // pred_region
      _
    $region9: #{tpu_custom_call.1} parent=1 // pred_fallthru
      _
    // Predicated region
    $region10: #{tpu_custom_call.1} parent=1 // pred_check
      _
    $region11: #{tpu_custom_call.1} parent=1 // pred_check_branch
      %19 = sbr.rel (0) target = $region13
    $region12: #{tpu_custom_call.1} parent=1 // pred_region
      _
    $region13: #{tpu_custom_call.1} parent=1 // pred_fallthru
      _
    // Predicated region
    $region14: #{tpu_custom_call.1} parent=1 // pred_check
      _
    $region15: #{tpu_custom_call.1} parent=1 // pred_check_branch
      %21 = sbr.rel (0) target = $region17
    $region16: #{tpu_custom_call.1} parent=1 // pred_region
      _
    $region17: #{tpu_custom_call.1} parent=1 // pred_fallthru
      _
    // Predicated region
    $region18: #{tpu_custom_call.1} parent=1 // pred_check
      _
    $region19: #{tpu_custom_call.1} parent=1 // pred_check_branch
      %23 = sbr.rel (0) target = $region21
    $region20: #{tpu_custom_call.1} parent=1 // pred_region
      _
    $region21: #{tpu_custom_call.1} parent=1 // pred_fallthru
      _
    // Predicated region
    $region22: #{tpu_custom_call.1} parent=1 // pred_check
      _
    $region23: #{tpu_custom_call.1} parent=1 // pred_check_branch
      %25 = sbr.rel (0) target = $region25
    $region24: #{tpu_custom_call.1} parent=1 // pred_region
      _
    $region25: #{tpu_custom_call.1} parent=1 // pred_fallthru
      _
    // Predicated region
    $region26: #{tpu_custom_call.1} parent=1 // pred_check
      _
    $region27: #{tpu_custom_call.1} parent=1 // pred_check_branch
      %27 = sbr.rel (0) target = $region29
    $region28: #{tpu_custom_call.1} parent=1 // pred_region
      _
    $region29: #{tpu_custom_call.1} parent=1 // pred_fallthru
      _
    // Predicated region
    $region30: #{tpu_custom_call.1} parent=1 // pred_check
      _
    $region31: #{tpu_custom_call.1} parent=1 // pred_check_branch
      %29 = sbr.rel (0) target = $region33
    $region32: #{tpu_custom_call.1} parent=1 // pred_region
      _
    $region33: #{tpu_custom_call.1} parent=1 // pred_fallthru
      _
    %v31 = vld [vmem:[%s0] sm:$0xf]
    %v32 = vld [vmem:[%s0 + $0x4] sm:$0xf]
    %v33 = vld [vmem:[%s1] sm:$0xf]
    %v34 = vld [vmem:[%s1 + $0x4] sm:$0xf]
    %v35 = vld [vmem:[%s1 + $0x8] sm:$0xf]
    %v36 = vld [vmem:[%s1 + $0xc] sm:$0xf]
    %v37 = vld [vmem:[%s1 + $0x10] sm:$0xf]
    %v38 = vld [vmem:[%s1 + $0x14] sm:$0xf]
    %v39 = vld [vmem:[%s1 + $0x18] sm:$0xf]
    %v40 = vld [vmem:[%s1 + $0x1c] sm:$0xf]
    %v41 = vld [vmem:[%s1 + $0x20] sm:$0xf]
    %v42 = vld [vmem:[%s1 + $0x24] sm:$0xf]
    %v43 = vld [vmem:[%s1 + $0x28] sm:$0xf]
    %v44 = vld [vmem:[%s1 + $0x2c] sm:$0xf]
    %v45 = vld [vmem:[%s1 + $0x30] sm:$0xf]
    %v46 = vld [vmem:[%s1 + $0x34] sm:$0xf]
    %v47 = vld [vmem:[%s1 + $0x38] sm:$0xf]
    %v48 = vld [vmem:[%s1 + $0x3c] sm:$0xf]
    %v49 = vld [vmem:[%s2] sm:$0x1]
    %v51 = vlaneseq
    %v52 = vshrl.u32 %v51, 7
    %v53 = vsub.s32 0, %v52
    %v54 = vrot.slane %v49, %v53
    %v58 = vunpack.c.l.b16 %v31
    %v59 = vunpack.c.l.b16 %v32
    %v60 = vpack.c.b16 %v59, %v58
    %v78 = vunpack.c.l.b16 %v33
    %v79 = vunpack.c.l.b16 %v34
    %v80 = vunpack.c.l.b16 %v35
    %v81 = vunpack.c.l.b16 %v36
    %v82 = vunpack.c.l.b16 %v37
    %v83 = vunpack.c.l.b16 %v38
    %v84 = vunpack.c.l.b16 %v39
    %v85 = vunpack.c.l.b16 %v40
    %v86 = vunpack.c.l.b16 %v41
    %v87 = vunpack.c.l.b16 %v42
    %v88 = vunpack.c.l.b16 %v43
    %v89 = vunpack.c.l.b16 %v44
    %v90 = vunpack.c.l.b16 %v45
    %v91 = vunpack.c.l.b16 %v46
    %v92 = vunpack.c.l.b16 %v47
    %v93 = vunpack.c.l.b16 %v48
    %v94 = vpack.c.b16 %v79, %v78
    %v95 = vpack.c.b16 %v81, %v80
    %v96 = vpack.c.b16 %v83, %v82
    %v97 = vpack.c.b16 %v85, %v84
    %v98 = vpack.c.b16 %v87, %v86
    %v99 = vpack.c.b16 %v89, %v88
    %v100 = vpack.c.b16 %v91, %v90
    %v101 = vpack.c.b16 %v93, %v92
    %110 = vmatprep.subr.bf16.mxu0 0
    %111 = vmatpush1.bf16.msra.mxu0 %v94
    %112 = vmatprep.subr.bf16.mxu0 0
    %113 = vmatpush1.bf16.msra.mxu0 %v95
    %114 = vmatprep.subr.bf16.mxu0 0
    %115 = vmatpush1.bf16.msra.mxu0 %v96
    %116 = vmatprep.subr.bf16.mxu0 0
    %117 = vmatpush1.bf16.msra.mxu0 %v97
    %118 = vmatprep.subr.bf16.mxu0 0
    %119 = vmatpush1.bf16.msra.mxu0 %v98
    %120 = vmatprep.subr.bf16.mxu0 0
    %121 = vmatpush1.bf16.msra.mxu0 %v99
    %122 = vmatprep.subr.bf16.mxu0 0
    %123 = vmatpush1.bf16.msra.mxu0 %v100
    %124 = vmatprep.subr.bf16.mxu0 0
    %125 = vmatpush1.bf16.msra.mxu0 %v101
    %126 = vmatprep.subr.bf16.mxu0 0
    %127 = vmatpush1.bf16.msra.mxu0 0
    %128 = vmatprep.subr.bf16.mxu0 0
    %129 = vmatpush1.bf16.msra.mxu0 0
    %130 = vmatprep.subr.bf16.mxu0 0
    %131 = vmatpush1.bf16.msra.mxu0 0
    %132 = vmatprep.subr.bf16.mxu0 0
    %133 = vmatpush1.bf16.msra.mxu0 0
    %134 = vmatprep.subr.bf16.mxu0 0
    %135 = vmatpush1.bf16.msra.mxu0 0
    %136 = vmatprep.subr.bf16.mxu0 0
    %137 = vmatpush1.bf16.msra.mxu0 0
    %138 = vmatprep.subr.bf16.mxu0 0
    %139 = vmatpush1.bf16.msra.mxu0 0
    %140 = vmatprep.subr.bf16.mxu0 0
    %141 = vmatpush1.bf16.msra.mxu0 0
    %142 = vmatprep.mubr.bf16.mxu0 0
    %143 = vmatmul.mubr.bf16.gmra.mrb[0].mxu0 %v60
    %v144 = vpop.f32.mrb[0].mxu0
    %v145 = vadd.f32 %v54, %v144
    %v146 = vpop.f32.mrb[0].mxu0
    %v147 = vpop.f32.mrb[0].mxu0
    %v148 = vadd.f32 %v54, %v147
    %v149 = vpop.f32.mrb[0].mxu0
    %150 = vdwg.mxu0
    %v151 = vmax.f32 %v145, 0.0
    %v152 = vmax.f32 %v148, 0.0
    %153 = vadd.xlane.f32.xlu0 %v151
    %v154 = vpop.xlane.xlu0 %153
    %155 = vadd.xlane.f32.xlu0 %v152
    %v156 = vpop.xlane.xlu0 %155
    %v157 = vrcp.pop 128.0
    %v158 = vmul.f32 %v154, %v157
    %v159 = vmul.f32 %v156, %v157
    %v160 = vsub.f32 %v151, %v158
    %v161 = vsub.f32 %v152, %v159
    %v162 = vmul.f32 %v160, %v160
    %v163 = vmul.f32 %v161, %v161
    %164 = vadd.xlane.f32.xlu0 %v162
    %v165 = vpop.xlane.xlu0 %164
    %166 = vadd.xlane.f32.xlu0 %v163
    %v167 = vpop.xlane.xlu0 %166
    %v168 = vmul.f32 %v165, %v157
    %v169 = vmul.f32 %v167, %v157
    %v170 = vadd.f32 %v168, 1e-05
    %v171 = vadd.f32 %v169, 1e-05
    %v172 = vrsqrt.pop %v170
    %v173 = vrsqrt.pop %v171
    %v174 = vmul.f32 %v160, %v172
    %v175 = vmul.f32 %v161, %v173
    %v176 = vld [vmem:[%s3] sm:$0x1]
    %v178 = vlaneseq
    %v179 = vshrl.u32 %v178, 7
    %v180 = vsub.s32 0, %v179
    %v181 = vrot.slane %v176, %v180
    %v183 = vmul.f32 %v174, %v181
    %v184 = vmul.f32 %v175, %v181
    %v185 = vld [vmem:[%s4] sm:$0x1]
    %v187 = vlaneseq
    %v188 = vshrl.u32 %v187, 7
    %v189 = vsub.s32 0, %v188
    %v190 = vrot.slane %v185, %v189
    %v192 = vadd.f32 %v183, %v190
    %v193 = vadd.f32 %v184, %v190
    %v194 = vld [vmem:[%s5] sm:$0x3]
    %vm195 = vcmask 130048
    %v197 = vsel %vm195, %v194, 0
    %199 = vmatprep.subr.mxu0 0.0
    %200 = vmatpush1.msra.mxu0 %v192
    %201 = vmatprep.subr.mxu0 0.0
    %202 = vmatpush1.msra.mxu0 %v193
    %203 = vmatprep.subr.mxu0 0.0
    %204 = vmatpush1.msra.mxu0 0.0
    %205 = vmatprep.subr.mxu0 0.0
    %206 = vmatpush1.msra.mxu0 0.0
    %207 = vmatprep.subr.mxu0 0.0
    %208 = vmatpush1.msra.mxu0 0.0
    %209 = vmatprep.subr.mxu0 0.0
    %210 = vmatpush1.msra.mxu0 0.0
    %211 = vmatprep.subr.mxu0 0.0
    %212 = vmatpush1.msra.mxu0 0.0
    %213 = vmatprep.subr.mxu0 0.0
    %214 = vmatpush1.msra.mxu0 0.0
    %215 = vmatprep.subr.mxu0 0.0
    %216 = vmatpush1.msra.mxu0 0.0
    %217 = vmatprep.subr.mxu0 0.0
    %218 = vmatpush1.msra.mxu0 0.0
    %219 = vmatprep.subr.mxu0 0.0
    %220 = vmatpush1.msra.mxu0 0.0
    %221 = vmatprep.subr.mxu0 0.0
    %222 = vmatpush1.msra.mxu0 0.0
    %223 = vmatprep.subr.mxu0 0.0
    %224 = vmatpush1.msra.mxu0 0.0
    %225 = vmatprep.subr.mxu0 0.0
    %226 = vmatpush1.msra.mxu0 0.0
    %227 = vmatprep.subr.mxu0 0.0
    %228 = vmatpush1.msra.mxu0 0.0
    %229 = vmatprep.subr.mxu0 0.0
    %230 = vmatpush1.msra.mxu0 0.0
    %231 = vmatprep.subr.mxu0 0.0
    %232 = vmatpush1.msra.mxu0 0.0
    %233 = vmatprep.subr.mxu0 0.0
    %234 = vmatpush1.msra.mxu0 0.0
    %235 = vmatprep.subr.mxu0 0.0
    %236 = vmatpush1.msra.mxu0 0.0
    %237 = vmatprep.subr.mxu0 0.0
    %238 = vmatpush1.msra.mxu0 0.0
    %239 = vmatprep.subr.mxu0 0.0
    %240 = vmatpush1.msra.mxu0 0.0
    %241 = vmatprep.subr.mxu0 0.0
    %242 = vmatpush1.msra.mxu0 0.0
    %243 = vmatprep.subr.mxu0 0.0
    %244 = vmatpush1.msra.mxu0 0.0
    %245 = vmatprep.subr.mxu0 0.0
    %246 = vmatpush1.msra.mxu0 0.0
    %247 = vmatprep.subr.mxu0 0.0
    %248 = vmatpush1.msra.mxu0 0.0
    %249 = vmatprep.subr.mxu0 0.0
    %250 = vmatpush1.msra.mxu0 0.0
    %251 = vmatprep.subr.mxu0 0.0
    %252 = vmatpush1.msra.mxu0 0.0
    %253 = vmatprep.subr.mxu0 0.0
    %254 = vmatpush1.msra.mxu0 0.0
    %255 = vmatprep.subr.mxu0 0.0
    %256 = vmatpush1.msra.mxu0 0.0
    %257 = vmatprep.subr.mxu0 0.0
    %258 = vmatpush1.msra.mxu0 0.0
    %259 = vmatprep.subr.mxu0 0.0
    %260 = vmatpush1.msra.mxu0 0.0
    %261 = vmatprep.subr.mxu0 0.0
    %262 = vmatpush1.msra.mxu0 0.0
    %263 = vmatprep.mubr.f32.mxu0 0.0
    %264 = vmatmul.mubr.f32.gmra.mrb[0].mxu0 %v197
    %v265 = vpop.f32.mrb[0].mxu0
    %v266 = vadd.f32 0.0, %v265
    %v267 = vpop.f32.mrb[0].mxu0
    %268 = vdwg.mxu0
    %vm269 = vcmask 123904
    %v270 = vsel %vm269, %v194, 0.0
    %271 = vadd.xlane.f32.xlu0 %v270
    %v272 = vpop.xlane.xlu0 %271
    %v273 = vrcp.pop %v272
    %v274 = vmul.f32 %v266, %v273
    %v275 = vld [vmem:[%s6] sm:$0xff]
    %v276 = vld [vmem:[%s6 + $0x8] sm:$0xff]
    %v277 = vld [vmem:[%s6 + $0x10] sm:$0xff]
    %v278 = vld [vmem:[%s6 + $0x18] sm:$0xff]
    %v279 = vld [vmem:[%s6 + $0x20] sm:$0xff]
    %v280 = vld [vmem:[%s6 + $0x28] sm:$0xff]
    %v281 = vld [vmem:[%s6 + $0x30] sm:$0xff]
    %v282 = vld [vmem:[%s6 + $0x38] sm:$0xff]
    %v283 = vld [vmem:[%s6 + $0x40] sm:$0xff]
    %v284 = vld [vmem:[%s6 + $0x48] sm:$0xff]
    %v285 = vld [vmem:[%s6 + $0x50] sm:$0xff]
    %v286 = vld [vmem:[%s6 + $0x58] sm:$0xff]
    %v287 = vld [vmem:[%s6 + $0x60] sm:$0xff]
    %v288 = vld [vmem:[%s6 + $0x68] sm:$0xff]
    %v289 = vld [vmem:[%s6 + $0x70] sm:$0xff]
    %v290 = vld [vmem:[%s6 + $0x78] sm:$0xff]
    %v291 = vld [vmem:[%s7] sm:$0x1]
    %v293 = vlaneseq
    %v294 = vshrl.u32 %v293, 7
    %v295 = vsub.s32 0, %v294
    %v296 = vrot.slane %v291, %v295
    %298 = vmatprep.subr.mxu0 0.0
    %299 = vmatpush1.msra.mxu0 %v275
    %300 = vmatprep.subr.mxu0 0.0
    %301 = vmatpush1.msra.mxu0 %v276
    %302 = vmatprep.subr.mxu0 0.0
    %303 = vmatpush1.msra.mxu0 %v277
    %304 = vmatprep.subr.mxu0 0.0
    %305 = vmatpush1.msra.mxu0 %v278
    %306 = vmatprep.subr.mxu0 0.0
    %307 = vmatpush1.msra.mxu0 %v279
    %308 = vmatprep.subr.mxu0 0.0
    %309 = vmatpush1.msra.mxu0 %v280
    %310 = vmatprep.subr.mxu0 0.0
    %311 = vmatpush1.msra.mxu0 %v281
    %312 = vmatprep.subr.mxu0 0.0
    %313 = vmatpush1.msra.mxu0 %v282
    %314 = vmatprep.subr.mxu0 0.0
    %315 = vmatpush1.msra.mxu0 %v283
    %316 = vmatprep.subr.mxu0 0.0
    %317 = vmatpush1.msra.mxu0 %v284
    %318 = vmatprep.subr.mxu0 0.0
    %319 = vmatpush1.msra.mxu0 %v285
    %320 = vmatprep.subr.mxu0 0.0
    %321 = vmatpush1.msra.mxu0 %v286
    %322 = vmatprep.subr.mxu0 0.0
    %323 = vmatpush1.msra.mxu0 %v287
    %324 = vmatprep.subr.mxu0 0.0
    %325 = vmatpush1.msra.mxu0 %v288
    %326 = vmatprep.subr.mxu0 0.0
    %327 = vmatpush1.msra.mxu0 %v289
    %328 = vmatprep.subr.mxu0 0.0
    %329 = vmatpush1.msra.mxu0 %v290
    %330 = vmatprep.subr.mxu0 0.0
    %331 = vmatpush1.msra.mxu0 0.0
    %332 = vmatprep.subr.mxu0 0.0
    %333 = vmatpush1.msra.mxu0 0.0
    %334 = vmatprep.subr.mxu0 0.0
    %335 = vmatpush1.msra.mxu0 0.0
    %336 = vmatprep.subr.mxu0 0.0
    %337 = vmatpush1.msra.mxu0 0.0
    %338 = vmatprep.subr.mxu0 0.0
    %339 = vmatpush1.msra.mxu0 0.0
    %340 = vmatprep.subr.mxu0 0.0
    %341 = vmatpush1.msra.mxu0 0.0
    %342 = vmatprep.subr.mxu0 0.0
    %343 = vmatpush1.msra.mxu0 0.0
    %344 = vmatprep.subr.mxu0 0.0
    %345 = vmatpush1.msra.mxu0 0.0
    %346 = vmatprep.subr.mxu0 0.0
    %347 = vmatpush1.msra.mxu0 0.0
    %348 = vmatprep.subr.mxu0 0.0
    %349 = vmatpush1.msra.mxu0 0.0
    %350 = vmatprep.subr.mxu0 0.0
    %351 = vmatpush1.msra.mxu0 0.0
    %352 = vmatprep.subr.mxu0 0.0
    %353 = vmatpush1.msra.mxu0 0.0
    %354 = vmatprep.subr.mxu0 0.0
    %355 = vmatpush1.msra.mxu0 0.0
    %356 = vmatprep.subr.mxu0 0.0
    %357 = vmatpush1.msra.mxu0 0.0
    %358 = vmatprep.subr.mxu0 0.0
    %359 = vmatpush1.msra.mxu0 0.0
    %360 = vmatprep.subr.mxu0 0.0
    %361 = vmatpush1.msra.mxu0 0.0
    %362 = vmatprep.mubr.f32.mxu0 0.0
    %363 = vmatmul.mubr.f32.gmra.mrb[0].mxu0 %v274
    %v364 = vpop.f32.mrb[0].mxu0
    %v365 = vadd.f32 %v296, %v364
    %v366 = vpop.f32.mrb[0].mxu0
    %367 = vdwg.mxu0
    %vm368 = vcmask 17408
    %369 = vst.msk [vmem:[#allocation2] sm:$0x3] %vm368, %v365
    // Predicated region
    $region34: #{tpu_custom_call.1} parent=1 // pred_check
      _
    $region35: #{tpu_custom_call.1} parent=1 // pred_check_branch
      %371 = sbr.rel (0) target = $region37
    $region36: #{tpu_custom_call.1} parent=1 // pred_region
      %s373 = ssub.s32 32, 32
      %374 = vsyncadd [#allocation3], %s373
      %s376 = sshll.u32 [#allocation2], 4
      %s377 = int_to_ptr.vmem [resolvable:$true] %s376
      %379 = dma.vmem_to_hbm [thread:$0]  %s377, 32, %s8, [#allocation3]
    $region37: #{tpu_custom_call.1} parent=1 // pred_fallthru
      _
    // Predicated region
    $region38: #{tpu_custom_call.1} parent=1 // pred_check
      _
    $region39: #{tpu_custom_call.1} parent=1 // pred_check_branch
      %381 = sbr.rel (0) target = $region41
    $region40: #{tpu_custom_call.1} parent=1 // pred_region
      %382 = dma.done [#allocation3], 32
    $region41: #{tpu_custom_call.1} parent=1 // pred_fallthru
      _
    %383 = vsyncpa [#allocation3], 1

</llo_original>
